<compile_context>
chip_gen: v5e
topology: v5e:2x2
jax: 0.10.0
libtpu: 0.0.40
codegen_flags: <defaults>
</compile_context>

<pallas_src>
import jax
import jax.numpy as jnp
from jax.experimental import pallas as pl
from jax.experimental.pallas import tpu as pltpu

INPUT_SIZE = 3        # L (the module's `input_size`)
K = 3                 # conv kernel size
C1, C2 = 32, 64       # conv1 / conv2 out channels
HID = 128             # fc1 hidden
NUM_CLASSES = 1
OUT_SUBPAD = 8        # output rows padded to one sublane group


def improved_cnn_kernel(xT_ref, w1_ref, b1_ref, w2_ref, b2_ref,
                        wfc1_ref, bfc1_ref, wfc2_ref, bfc2_ref, out_ref):
    # conv1 (1->C1, k=3, pad=1) + ReLU as a banded matmul: (L*C1, L+2) @ (L+2, Bt)
    h1 = jnp.maximum(
        jnp.dot(w1_ref[...], xT_ref[...], preferred_element_type=jnp.float32)
        + b1_ref[...], 0.0)
    # conv2 (C1->C2, k=3, pad=1) + ReLU: (L*C2, L*C1) @ (L*C1, Bt)
    h2 = jnp.maximum(
        jnp.dot(w2_ref[...], h1.astype(jnp.bfloat16),
                preferred_element_type=jnp.float32) + b2_ref[...], 0.0)
    # flatten + fc1 + ReLU (PyTorch flatten order folded into the banded weight)
    z = jnp.maximum(
        jnp.dot(wfc1_ref[...], h2.astype(jnp.bfloat16),
                preferred_element_type=jnp.float32) + bfc1_ref[...], 0.0)
    # TODO(synk): nn.Dropout(0.3) is treated as identity (inference/eval semantics).
    # fc2 (rows padded to 8 sublanes) -> raw logits; sigmoid applied in the wrapper.
    out_ref[...] = (
        jnp.dot(wfc2_ref[...], z.astype(jnp.bfloat16),
                preferred_element_type=jnp.float32) + bfc2_ref[...])


def init_params(key):
    """Deterministic parameter init with PyTorch shapes."""
    ks = jax.random.split(key, 8)
    w1 = 0.2 * jax.random.normal(ks[0], (C1, 1, K), jnp.float32)               # Conv1d(1,32,3)
    b1 = 0.1 * jax.random.normal(ks[1], (C1,), jnp.float32)
    w2 = 0.1 * jax.random.normal(ks[2], (C2, C1, K), jnp.float32)              # Conv1d(32,64,3)
    b2 = 0.1 * jax.random.normal(ks[3], (C2,), jnp.float32)
    wfc1 = 0.05 * jax.random.normal(ks[4], (HID, C2 * INPUT_SIZE), jnp.float32)  # Linear(192,128)
    bfc1 = 0.1 * jax.random.normal(ks[5], (HID,), jnp.float32)
    wfc2 = 0.05 * jax.random.normal(ks[6], (NUM_CLASSES, HID), jnp.float32)      # Linear(128,1)
    bfc2 = 0.1 * jax.random.normal(ks[7], (NUM_CLASSES,), jnp.float32)
    return (w1, b1, w2, b2, wfc1, bfc1, wfc2, bfc2)


def _banded_weights(params):
    """Build feature-major banded / padded weights (static, runs once in wrapper).

    Weights are bf16 (MXU-native); biases stay f32 (added after f32 accumulation).
    """
    w1, b1, w2, b2, wfc1, bfc1, wfc2, bfc2 = params
    L = INPUT_SIZE

    # conv1 band: (L+2, L*C1), column block t holds the taps for output time t.
    w1t = jnp.transpose(w1[:, 0, :], (1, 0))                    # (K, C1): [k, c] = w1[c,0,k]
    w1b = jnp.zeros((L + 2, L * C1), jnp.float32)
    for t in range(L):
        w1b = w1b.at[t:t + K, t * C1:(t + 1) * C1].set(w1t)
    w1bT = w1b.T.astype(jnp.bfloat16)                           # (L*C1, L+2)
    b1c = jnp.tile(b1, L).reshape(L * C1, 1)

    # conv2 band: (L*C1, L*C2); zero-padding handled by skipping out-of-range taps.
    w2k = jnp.transpose(w2, (2, 1, 0))                          # (K, C1, C2): [k,ci,co]=w2[co,ci,k]
    w2b = jnp.zeros((L * C1, L * C2), jnp.float32)
    for t in range(L):
        for k in range(K):
            src = t - 1 + k
            if 0 <= src < L:
                w2b = w2b.at[src * C1:(src + 1) * C1,
                             t * C2:(t + 1) * C2].set(w2k[k])
    w2bT = w2b.T.astype(jnp.bfloat16)                           # (L*C2, L*C1)
    b2c = jnp.tile(b2, L).reshape(L * C2, 1)

    # fc1: row index t*C2 + c  <-  wfc1[:, c*L + t] (PyTorch flatten order).
    wfc1b = jnp.transpose(wfc1.reshape(HID, C2, L), (2, 1, 0)).reshape(L * C2, HID)
    wfc1bT = wfc1b.T.astype(jnp.bfloat16)                       # (HID, L*C2)
    bfc1c = bfc1.reshape(HID, 1)

    # fc2: pad output rows to OUT_SUBPAD sublanes.
    wfc2p = jnp.zeros((OUT_SUBPAD, HID), jnp.float32).at[:NUM_CLASSES, :].set(wfc2)
    wfc2p = wfc2p.astype(jnp.bfloat16)
    bfc2p = jnp.zeros((OUT_SUBPAD, 1), jnp.float32).at[:NUM_CLASSES, 0].set(bfc2)

    return (w1bT, b1c, w2bT, b2c, wfc1bT, bfc1c, wfc2p, bfc2p)


def _round_up(v, m):
    return ((v + m - 1) // m) * m


def improved_cnn_forward(x, params, b_tile=None):
    """x: (B, 1, INPUT_SIZE) float32 -> (B, NUM_CLASSES) float32."""
    L = INPUT_SIZE
    B = x.shape[0]

    # Batch tile: multiple of 128 (batch is the lane axis), capped at 2048,
    # and small enough that the grid has >= 2 steps when B allows it (v7x 2 TCs).
    if b_tile is None:
        half = _round_up(max(1, -(-B // 2)), 128)
        b_tile = max(128, min(2048, half))
    else:
        b_tile = _round_up(b_tile, 128)
    n_tiles = pl.cdiv(B, b_tile)
    b_pad = n_tiles * b_tile

    # Input prep: drop singleton channel, zero-pad length (conv pad=1),
    # transpose to feature-major (L+2, B), pad batch, cast to bf16.
    xT = jnp.pad(x[:, 0, :], ((0, 0), (1, 1))).T                 # (L+2, B)
    xT = jnp.pad(xT, ((0, 0), (0, b_pad - B))).astype(jnp.bfloat16)

    w1bT, b1c, w2bT, b2c, wfc1bT, bfc1c, wfc2p, bfc2p = _banded_weights(params)
    args = (xT, w1bT, b1c, w2bT, b2c, wfc1bT, bfc1c, wfc2p, bfc2p)

    whole = lambda i: (0, 0)                                     # weights/biases: one block
    out = pl.pallas_call(
        improved_cnn_kernel,
        out_shape=jax.ShapeDtypeStruct((OUT_SUBPAD, b_pad), jnp.float32),
        grid_spec=pltpu.PrefetchScalarGridSpec(
            num_scalar_prefetch=0,
            grid=(n_tiles,),
            in_specs=[
                pl.BlockSpec((L + 2, b_tile), lambda i: (0, i)),   # x tile (batch on lanes)
                pl.BlockSpec((L * C1, L + 2), whole),
                pl.BlockSpec((L * C1, 1), whole),
                pl.BlockSpec((L * C2, L * C1), whole),
                pl.BlockSpec((L * C2, 1), whole),
                pl.BlockSpec((HID, L * C2), whole),
                pl.BlockSpec((HID, 1), whole),
                pl.BlockSpec((OUT_SUBPAD, HID), whole),
                pl.BlockSpec((OUT_SUBPAD, 1), whole),
            ],
            out_specs=pl.BlockSpec((OUT_SUBPAD, b_tile), lambda i: (0, i)),
        ),
        compiler_params=pltpu.CompilerParams(
            dimension_semantics=("parallel",),                   # shard batch across TCs (v7x)
            vmem_limit_bytes=32 << 20,
        ),
    )(*args)

    logits = out[:NUM_CLASSES, :B].T                             # (B, NUM_CLASSES)
    return jax.nn.sigmoid(logits)


def reference_forward(x, params):
    """Pure-JAX f32 reference replicating the PyTorch forward (dropout in eval mode)."""
    w1, b1, w2, b2, wfc1, bfc1, wfc2, bfc2 = params

    def conv1d(xin, w, b):
        xp = jnp.pad(xin, ((0, 0), (0, 0), (1, 1)))
        cols = [jnp.einsum('bck,ock->bo', xp[:, :, t:t + K], w)
                for t in range(xin.shape[-1])]
        return jnp.stack(cols, axis=-1) + b[None, :, None]

    h = jax.nn.relu(conv1d(x, w1, b1))
    h = jax.nn.relu(conv1d(h, w2, b2))
    h = h.reshape(h.shape[0], -1)                                # (B, C2*L), c-major
    h = jax.nn.relu(h @ wfc1.T + bfc1)
    return jax.nn.sigmoid(h @ wfc2.T + bfc2)


if __name__ == "__main__":
    key = jax.random.PRNGKey(0)
    k_params, k_x1, k_x2 = jax.random.split(key, 3)
    params = init_params(k_params)

    # Small primary check (B=2), NCL layout like PyTorch Conv1d.
    x = jax.random.normal(k_x1, (2, 1, INPUT_SIZE), jnp.float32)
    out = jax.block_until_ready(improved_cnn_forward(x, params))
    ref = reference_forward(x, params)
    assert out.shape == (2, NUM_CLASSES)
    assert jnp.allclose(out, ref, atol=1e-2, rtol=1e-2), (out, ref)

    # Multi-tile / ragged-batch check (grid > 1, batch padded to the tile).
    xb = jax.random.normal(k_x2, (300, 1, INPUT_SIZE), jnp.float32)
    outb = jax.block_until_ready(improved_cnn_forward(xb, params, b_tile=128))
    refb = reference_forward(xb, params)
    assert outb.shape == (300, NUM_CLASSES)
    assert jnp.allclose(outb, refb, atol=1e-2, rtol=1e-2)

    print("KERNEL_OK")
</pallas_src>

<mosaic_0001>
module attributes {stable_mosaic.version = 11 : i64} {
  func.func @improved_cnn_kernel(%arg0: i32, %arg1: memref<5x128xbf16, #tpu.memory_space<vmem>>, %arg2: memref<96x5xbf16, #tpu.memory_space<vmem>>, %arg3: memref<96x1xf32, #tpu.memory_space<vmem>>, %arg4: memref<192x96xbf16, #tpu.memory_space<vmem>>, %arg5: memref<192x1xf32, #tpu.memory_space<vmem>>, %arg6: memref<128x192xbf16, #tpu.memory_space<vmem>>, %arg7: memref<128x1xf32, #tpu.memory_space<vmem>>, %arg8: memref<8x128xbf16, #tpu.memory_space<vmem>>, %arg9: memref<8x1xf32, #tpu.memory_space<vmem>>, %arg10: memref<8x128xf32, #tpu.memory_space<vmem>>) attributes {dimension_semantics = [#tpu.dimension_semantics<parallel>], iteration_bounds = array<i64: 1>, scalar_prefetch = 0 : i64, scratch_operands = 0 : i64, tpu.core_type = #tpu.core_type<tc>, window_params = [{transform_indices = @transform_0, window_bounds = array<i64: 5, 128>}, {pipeline_mode = #tpu.pipeline_mode<synchronous>, transform_indices = @transform_1, window_bounds = array<i64: 96, 5>}, {pipeline_mode = #tpu.pipeline_mode<synchronous>, transform_indices = @transform_2, window_bounds = array<i64: 96, 1>}, {pipeline_mode = #tpu.pipeline_mode<synchronous>, transform_indices = @transform_3, window_bounds = array<i64: 192, 96>}, {pipeline_mode = #tpu.pipeline_mode<synchronous>, transform_indices = @transform_4, window_bounds = array<i64: 192, 1>}, {pipeline_mode = #tpu.pipeline_mode<synchronous>, transform_indices = @transform_5, window_bounds = array<i64: 128, 192>}, {pipeline_mode = #tpu.pipeline_mode<synchronous>, transform_indices = @transform_6, window_bounds = array<i64: 128, 1>}, {pipeline_mode = #tpu.pipeline_mode<synchronous>, transform_indices = @transform_7, window_bounds = array<i64: 8, 128>}, {pipeline_mode = #tpu.pipeline_mode<synchronous>, transform_indices = @transform_8, window_bounds = array<i64: 8, 1>}, {transform_indices = @transform_9, window_bounds = array<i64: 8, 128>}]} {
    %c0 = arith.constant 0 : index
    %c0_0 = arith.constant 0 : index
    %0 = vector.load %arg2[%c0, %c0_0] : memref<96x5xbf16, #tpu.memory_space<vmem>>, vector<96x5xbf16>
    %c0_1 = arith.constant 0 : index
    %c0_2 = arith.constant 0 : index
    %1 = vector.load %arg1[%c0_1, %c0_2] : memref<5x128xbf16, #tpu.memory_space<vmem>>, vector<5x128xbf16>
    %cst = arith.constant dense<0.000000e+00> : vector<96x128xf32>
    %2 = tpu.matmul %0, %1, %cst {dimension_numbers = #tpu.dot_dimension_numbers<[1], [0], [0], [1], [0, 0, 1, 1], [], []>} : vector<96x5xbf16>, vector<5x128xbf16>, vector<96x128xf32> -> vector<96x128xf32>
    %c0_3 = arith.constant 0 : index
    %c0_4 = arith.constant 0 : index
    %3 = vector.load %arg3[%c0_3, %c0_4] : memref<96x1xf32, #tpu.memory_space<vmem>>, vector<96x1xf32>
    %4 = vector.broadcast %3 : vector<96x1xf32> to vector<96x128xf32>
    %5 = arith.addf %2, %4 : vector<96x128xf32>
    %cst_5 = arith.constant 0.000000e+00 : f32
    %6 = vector.broadcast %cst_5 : f32 to vector<96x128xf32>
    %7 = arith.maximumf %5, %6 : vector<96x128xf32>
    %c0_6 = arith.constant 0 : index
    %c0_7 = arith.constant 0 : index
    %8 = vector.load %arg4[%c0_6, %c0_7] : memref<192x96xbf16, #tpu.memory_space<vmem>>, vector<192x96xbf16>
    %9 = arith.truncf %7 : vector<96x128xf32> to vector<96x128xbf16>
    %cst_8 = arith.constant dense<0.000000e+00> : vector<192x128xf32>
    %10 = tpu.matmul %8, %9, %cst_8 {dimension_numbers = #tpu.dot_dimension_numbers<[1], [0], [0], [1], [0, 0, 1, 1], [], []>} : vector<192x96xbf16>, vector<96x128xbf16>, vector<192x128xf32> -> vector<192x128xf32>
    %c0_9 = arith.constant 0 : index
    %c0_10 = arith.constant 0 : index
    %11 = vector.load %arg5[%c0_9, %c0_10] : memref<192x1xf32, #tpu.memory_space<vmem>>, vector<192x1xf32>
    %12 = vector.broadcast %11 : vector<192x1xf32> to vector<192x128xf32>
    %13 = arith.addf %10, %12 : vector<192x128xf32>
    %cst_11 = arith.constant 0.000000e+00 : f32
    %14 = vector.broadcast %cst_11 : f32 to vector<192x128xf32>
    %15 = arith.maximumf %13, %14 : vector<192x128xf32>
    %c0_12 = arith.constant 0 : index
    %c0_13 = arith.constant 0 : index
    %16 = vector.load %arg6[%c0_12, %c0_13] : memref<128x192xbf16, #tpu.memory_space<vmem>>, vector<128x192xbf16>
    %17 = arith.truncf %15 : vector<192x128xf32> to vector<192x128xbf16>
    %cst_14 = arith.constant dense<0.000000e+00> : vector<128x128xf32>
    %18 = tpu.matmul %16, %17, %cst_14 {dimension_numbers = #tpu.dot_dimension_numbers<[1], [0], [0], [1], [0, 0, 1, 1], [], []>} : vector<128x192xbf16>, vector<192x128xbf16>, vector<128x128xf32> -> vector<128x128xf32>
    %c0_15 = arith.constant 0 : index
    %c0_16 = arith.constant 0 : index
    %19 = vector.load %arg7[%c0_15, %c0_16] : memref<128x1xf32, #tpu.memory_space<vmem>>, vector<128x1xf32>
    %20 = vector.broadcast %19 : vector<128x1xf32> to vector<128x128xf32>
    %21 = arith.addf %18, %20 : vector<128x128xf32>
    %cst_17 = arith.constant 0.000000e+00 : f32
    %22 = vector.broadcast %cst_17 : f32 to vector<128x128xf32>
    %23 = arith.maximumf %21, %22 : vector<128x128xf32>
    %c0_18 = arith.constant 0 : index
    %c0_19 = arith.constant 0 : index
    %24 = vector.load %arg8[%c0_18, %c0_19] : memref<8x128xbf16, #tpu.memory_space<vmem>>, vector<8x128xbf16>
    %25 = arith.truncf %23 : vector<128x128xf32> to vector<128x128xbf16>
    %cst_20 = arith.constant dense<0.000000e+00> : vector<8x128xf32>
    %26 = tpu.matmul %24, %25, %cst_20 {dimension_numbers = #tpu.dot_dimension_numbers<[1], [0], [0], [1], [0, 0, 1, 1], [], []>} : vector<8x128xbf16>, vector<128x128xbf16>, vector<8x128xf32> -> vector<8x128xf32>
    %c0_21 = arith.constant 0 : index
    %c0_22 = arith.constant 0 : index
    %27 = vector.load %arg9[%c0_21, %c0_22] : memref<8x1xf32, #tpu.memory_space<vmem>>, vector<8x1xf32>
    %28 = vector.broadcast %27 : vector<8x1xf32> to vector<8x128xf32>
    %29 = arith.addf %26, %28 : vector<8x128xf32>
    %c0_23 = arith.constant 0 : index
    %c0_24 = arith.constant 0 : index
    %30 = vector.load %arg10[%c0_23, %c0_24] : memref<8x128xf32, #tpu.memory_space<vmem>>, vector<8x128xf32>
    tpu.vector_store %arg10[%c0_23, %c0_24], %29 {strides = array<i32>} : memref<8x128xf32, #tpu.memory_space<vmem>>, vector<8x128xf32>,
    return
  }
  func.func @transform_0(%arg0: i32) -> (i32, i32) {
    %c0_i32 = arith.constant 0 : i32
    %c0_i32_0 = arith.constant 0 : i32
    return %c0_i32, %arg0 : i32, i32
  }
  func.func @transform_1(%arg0: i32) -> (i32, i32) {
    %c0_i32 = arith.constant 0 : i32
    %c0_i32_0 = arith.constant 0 : i32
    %c0_i32_1 = arith.constant 0 : i32
    return %c0_i32, %c0_i32_0 : i32, i32
  }
  func.func @transform_2(%arg0: i32) -> (i32, i32) {
    %c0_i32 = arith.constant 0 : i32
    %c0_i32_0 = arith.constant 0 : i32
    %c0_i32_1 = arith.constant 0 : i32
    return %c0_i32, %c0_i32_0 : i32, i32
  }
  func.func @transform_3(%arg0: i32) -> (i32, i32) {
    %c0_i32 = arith.constant 0 : i32
    %c0_i32_0 = arith.constant 0 : i32
    %c0_i32_1 = arith.constant 0 : i32
    return %c0_i32, %c0_i32_0 : i32, i32
  }
  func.func @transform_4(%arg0: i32) -> (i32, i32) {
    %c0_i32 = arith.constant 0 : i32
    %c0_i32_0 = arith.constant 0 : i32
    %c0_i32_1 = arith.constant 0 : i32
    return %c0_i32, %c0_i32_0 : i32, i32
  }
  func.func @transform_5(%arg0: i32) -> (i32, i32) {
    %c0_i32 = arith.constant 0 : i32
    %c0_i32_0 = arith.constant 0 : i32
    %c0_i32_1 = arith.constant 0 : i32
    return %c0_i32, %c0_i32_0 : i32, i32
  }
  func.func @transform_6(%arg0: i32) -> (i32, i32) {
    %c0_i32 = arith.constant 0 : i32
    %c0_i32_0 = arith.constant 0 : i32
    %c0_i32_1 = arith.constant 0 : i32
    return %c0_i32, %c0_i32_0 : i32, i32
  }
  func.func @transform_7(%arg0: i32) -> (i32, i32) {
    %c0_i32 = arith.constant 0 : i32
    %c0_i32_0 = arith.constant 0 : i32
    %c0_i32_1 = arith.constant 0 : i32
    return %c0_i32, %c0_i32_0 : i32, i32
  }
  func.func @transform_8(%arg0: i32) -> (i32, i32) {
    %c0_i32 = arith.constant 0 : i32
    %c0_i32_0 = arith.constant 0 : i32
    %c0_i32_1 = arith.constant 0 : i32
    return %c0_i32, %c0_i32_0 : i32, i32
  }
  func.func @transform_9(%arg0: i32) -> (i32, i32) {
    %c0_i32 = arith.constant 0 : i32
    %c0_i32_0 = arith.constant 0 : i32
    return %c0_i32, %arg0 : i32, i32
  }
}

</mosaic_0001>

<llo_original>
// kernel: tpu_custom_call.1
$region0: #{tpu_custom_call.1}
  #allocation0 [shape = 'u32[]', space=smem, size = 0x4, offset = 0x4, fixed_abs, tag = 'smem constant byte address 0x4 - core index']
  #allocation1 [shape = 'u32[72,128]{1,0:T(1,128)}', space=vmem, size = 0x9000, scoped, tag = 'internal scratch']
  %s0 = inlined_call_operand.vmem [shape: bf16[5,128], index: 0, kind: input, shape index: {}]
  %s1 = inlined_call_operand.vmem [shape: bf16[96,5], index: 1, kind: input, shape index: {}]
  %s2 = inlined_call_operand.vmem [shape: f32[96,1], index: 2, kind: input, shape index: {}]
  %s3 = inlined_call_operand.vmem [shape: bf16[192,96], index: 3, kind: input, shape index: {}]
  %s4 = inlined_call_operand.vmem [shape: f32[192,1], index: 4, kind: input, shape index: {}]
  %s5 = inlined_call_operand.vmem [shape: bf16[128,192], index: 5, kind: input, shape index: {}]
  %s6 = inlined_call_operand.vmem [shape: f32[128,1], index: 6, kind: input, shape index: {}]
  %s7 = inlined_call_operand.vmem [shape: bf16[8,128], index: 7, kind: input, shape index: {}]
  %s8 = inlined_call_operand.vmem [shape: f32[8,1], index: 8, kind: input, shape index: {}]
  %s9 = inlined_call_operand.hbm [shape: f32[8,128], index: 9, kind: output, shape index: {}]
  %s10 = sld [smem:[#allocation0]]
  $region46: #{tpu_custom_call.1} parent=0
    _
  %s12 = ssub.s32 1, %s10
  %s13 = scalar_select 0, %s12, %s10
  $region1: #{tpu_custom_call.1} parent=0
    #allocation2 [shape = 'u8[4096]{0}', space=vmem, size = 0x1000, scoped, tag = 'output window, operand 0, single buffered']
    #allocation3 [shape = 's32[1]{0}', space=sflag, size = 0x4, scoped, tag = 'scoped memory for tpu_custom_call.1']
    %14 = vsyncpa [#allocation3], 0
    // Predicated region
    $region2: #{tpu_custom_call.1} parent=1 // pred_check
      _
    $region3: #{tpu_custom_call.1} parent=1 // pred_check_branch
      %16 = sbr.rel (0) target = $region5
    $region4: #{tpu_custom_call.1} parent=1 // pred_region
      _
    $region5: #{tpu_custom_call.1} parent=1 // pred_fallthru
      _
    // Predicated region
    $region6: #{tpu_custom_call.1} parent=1 // pred_check
      _
    $region7: #{tpu_custom_call.1} parent=1 // pred_check_branch
      %18 = sbr.rel (0) target = $region9
    $region8: #{tpu_custom_call.1} parent=1 // pred_region
      _
    $region9: #{tpu_custom_call.1} parent=1 // pred_fallthru
      _
    // Predicated region
    $region10: #{tpu_custom_call.1} parent=1 // pred_check
      _
    $region11: #{tpu_custom_call.1} parent=1 // pred_check_branch
      %20 = sbr.rel (0) target = $region13
    $region12: #{tpu_custom_call.1} parent=1 // pred_region
      _
    $region13: #{tpu_custom_call.1} parent=1 // pred_fallthru
      _
    // Predicated region
    $region14: #{tpu_custom_call.1} parent=1 // pred_check
      _
    $region15: #{tpu_custom_call.1} parent=1 // pred_check_branch
      %22 = sbr.rel (0) target = $region17
    $region16: #{tpu_custom_call.1} parent=1 // pred_region
      _
    $region17: #{tpu_custom_call.1} parent=1 // pred_fallthru
      _
    // Predicated region
    $region18: #{tpu_custom_call.1} parent=1 // pred_check
      _
    $region19: #{tpu_custom_call.1} parent=1 // pred_check_branch
      %24 = sbr.rel (0) target = $region21
    $region20: #{tpu_custom_call.1} parent=1 // pred_region
      _
    $region21: #{tpu_custom_call.1} parent=1 // pred_fallthru
      _
    // Predicated region
    $region22: #{tpu_custom_call.1} parent=1 // pred_check
      _
    $region23: #{tpu_custom_call.1} parent=1 // pred_check_branch
      %26 = sbr.rel (0) target = $region25
    $region24: #{tpu_custom_call.1} parent=1 // pred_region
      _
    $region25: #{tpu_custom_call.1} parent=1 // pred_fallthru
      _
    // Predicated region
    $region26: #{tpu_custom_call.1} parent=1 // pred_check
      _
    $region27: #{tpu_custom_call.1} parent=1 // pred_check_branch
      %28 = sbr.rel (0) target = $region29
    $region28: #{tpu_custom_call.1} parent=1 // pred_region
      _
    $region29: #{tpu_custom_call.1} parent=1 // pred_fallthru
      _
    // Predicated region
    $region30: #{tpu_custom_call.1} parent=1 // pred_check
      _
    $region31: #{tpu_custom_call.1} parent=1 // pred_check_branch
      %30 = sbr.rel (0) target = $region33
    $region32: #{tpu_custom_call.1} parent=1 // pred_region
      _
    $region33: #{tpu_custom_call.1} parent=1 // pred_fallthru
      _
    // Predicated region
    $region34: #{tpu_custom_call.1} parent=1 // pred_check
      _
    $region35: #{tpu_custom_call.1} parent=1 // pred_check_branch
      %32 = sbr.rel (0) target = $region37
    $region36: #{tpu_custom_call.1} parent=1 // pred_region
      _
    $region37: #{tpu_custom_call.1} parent=1 // pred_fallthru
      _
    %v34 = vld [vmem:[%s1] sm:$0xf]
    %v35 = vld [vmem:[%s1 + $0x4] sm:$0xf]
    %v36 = vld [vmem:[%s1 + $0x8] sm:$0xf]
    %v37 = vld [vmem:[%s1 + $0xc] sm:$0xf]
    %v38 = vld [vmem:[%s1 + $0x10] sm:$0xf]
    %v39 = vld [vmem:[%s1 + $0x14] sm:$0xf]
    %v40 = vld [vmem:[%s1 + $0x18] sm:$0xf]
    %v41 = vld [vmem:[%s1 + $0x1c] sm:$0xf]
    %v42 = vld [vmem:[%s1 + $0x20] sm:$0xf]
    %v43 = vld [vmem:[%s1 + $0x24] sm:$0xf]
    %v44 = vld [vmem:[%s1 + $0x28] sm:$0xf]
    %v45 = vld [vmem:[%s1 + $0x2c] sm:$0xf]
    %v46 = vld [vmem:[%s0] sm:$0x7]
    %v47 = vld [vmem:[%s2] sm:$0xff]
    %v48 = vld [vmem:[%s2 + $0x8] sm:$0xff]
    %v49 = vld [vmem:[%s2 + $0x10] sm:$0xff]
    %v50 = vld [vmem:[%s2 + $0x18] sm:$0xff]
    %v51 = vld [vmem:[%s2 + $0x20] sm:$0xff]
    %v52 = vld [vmem:[%s2 + $0x28] sm:$0xff]
    %v53 = vld [vmem:[%s2 + $0x30] sm:$0xff]
    %v54 = vld [vmem:[%s2 + $0x38] sm:$0xff]
    %v55 = vld [vmem:[%s2 + $0x40] sm:$0xff]
    %v56 = vld [vmem:[%s2 + $0x48] sm:$0xff]
    %v57 = vld [vmem:[%s2 + $0x50] sm:$0xff]
    %v58 = vld [vmem:[%s2 + $0x58] sm:$0xff]
    %60 = vset.pattern.permute.xlu0 0
    %61 = vperm.xlu0 %60, %v47
    %v62 = vpop.permute.xlu0 %61
    %65 = vset.pattern.permute.xlu0 0
    %66 = vperm.xlu0 %65, %v48
    %v67 = vpop.permute.xlu0 %66
    %70 = vset.pattern.permute.xlu0 0
    %71 = vperm.xlu0 %70, %v49
    %v72 = vpop.permute.xlu0 %71
    %75 = vset.pattern.permute.xlu0 0
    %76 = vperm.xlu0 %75, %v50
    %v77 = vpop.permute.xlu0 %76
    %80 = vset.pattern.permute.xlu0 0
    %81 = vperm.xlu0 %80, %v51
    %v82 = vpop.permute.xlu0 %81
    %85 = vset.pattern.permute.xlu0 0
    %86 = vperm.xlu0 %85, %v52
    %v87 = vpop.permute.xlu0 %86
    %90 = vset.pattern.permute.xlu0 0
    %91 = vperm.xlu0 %90, %v53
    %v92 = vpop.permute.xlu0 %91
    %95 = vset.pattern.permute.xlu0 0
    %96 = vperm.xlu0 %95, %v54
    %v97 = vpop.permute.xlu0 %96
    %100 = vset.pattern.permute.xlu0 0
    %101 = vperm.xlu0 %100, %v55
    %v102 = vpop.permute.xlu0 %101
    %105 = vset.pattern.permute.xlu0 0
    %106 = vperm.xlu0 %105, %v56
    %v107 = vpop.permute.xlu0 %106
    %110 = vset.pattern.permute.xlu0 0
    %111 = vperm.xlu0 %110, %v57
    %v112 = vpop.permute.xlu0 %111
    %115 = vset.pattern.permute.xlu0 0
    %116 = vperm.xlu0 %115, %v58
    %v117 = vpop.permute.xlu0 %116
    %v131 = vunpack.c.l.b16 %v34
    %v132 = vunpack.c.l.b16 %v35
    %v133 = vunpack.c.l.b16 %v36
    %v134 = vunpack.c.l.b16 %v37
    %v135 = vunpack.c.l.b16 %v38
    %v136 = vunpack.c.l.b16 %v39
    %v137 = vunpack.c.l.b16 %v40
    %v138 = vunpack.c.l.b16 %v41
    %v139 = vunpack.c.l.b16 %v42
    %v140 = vunpack.c.l.b16 %v43
    %v141 = vunpack.c.l.b16 %v44
    %v142 = vunpack.c.l.b16 %v45
    %v143 = vpack.c.b16 %v132, %v131
    %v144 = vpack.c.b16 %v134, %v133
    %v145 = vpack.c.b16 %v136, %v135
    %v146 = vpack.c.b16 %v138, %v137
    %v147 = vpack.c.b16 %v140, %v139
    %v148 = vpack.c.b16 %v142, %v141
    %vm149 = vcmask 39936
    %v151 = vsel %vm149, %v143, 0
    %v154 = vsel %vm149, %v144, 0
    %v157 = vsel %vm149, %v145, 0
    %v160 = vsel %vm149, %v146, 0
    %v163 = vsel %vm149, %v147, 0
    %v166 = vsel %vm149, %v148, 0
    %vm168 = vcmask 1041408
    %vm169 = vcmask 1042432
    %v170 = vsel %vm168, 4294967295, 65535
    %v171 = vsel %vm169, %v170, 0
    %v173 = vand.u32 %v46, %v171
    %175 = vmatpush.bf16.msra.mxu0 0
    %176 = vmatpush.bf16.msra.mxu0 0
    %177 = vmatpush.bf16.msra.mxu0 0
    %178 = vmatpush.bf16.msra.mxu0 0
    %179 = vmatpush.bf16.msra.mxu0 0
    %180 = vmatpush.bf16.msra.mxu0 0
    %181 = vmatpush.bf16.msra.mxu0 0
    %182 = vmatpush.bf16.msra.mxu0 %v173
    %183 = vmatmul.bf16.gmra.mxu0 %v151
    %v184 = vpop.f32.mrf.mxu0
    %v185 = vadd.f32 %v62, %v184
    %v186 = vpop.f32.mrf.mxu0
    %v187 = vadd.f32 %v67, %v186
    %188 = vmatmul.bf16.gmra.mxu0 %v154
    %v189 = vpop.f32.mrf.mxu0
    %v190 = vadd.f32 %v72, %v189
    %v191 = vpop.f32.mrf.mxu0
    %v192 = vadd.f32 %v77, %v191
    %193 = vmatmul.bf16.gmra.mxu0 %v157
    %v194 = vpop.f32.mrf.mxu0
    %v195 = vadd.f32 %v82, %v194
    %v196 = vpop.f32.mrf.mxu0
    %v197 = vadd.f32 %v87, %v196
    %198 = vmatmul.bf16.gmra.mxu0 %v160
    %v199 = vpop.f32.mrf.mxu0
    %v200 = vadd.f32 %v92, %v199
    %v201 = vpop.f32.mrf.mxu0
    %v202 = vadd.f32 %v97, %v201
    %203 = vmatmul.bf16.gmra.mxu0 %v163
    %v204 = vpop.f32.mrf.mxu0
    %v205 = vadd.f32 %v102, %v204
    %v206 = vpop.f32.mrf.mxu0
    %v207 = vadd.f32 %v107, %v206
    %208 = vmatmul.bf16.gmra.mxu0 %v166
    %v209 = vpop.f32.mrf.mxu0
    %v210 = vadd.f32 %v112, %v209
    %v211 = vpop.f32.mrf.mxu0
    %v212 = vadd.f32 %v117, %v211
    %213 = vdwg.mxu0
    %v214 = vmax.f32 %v185, 0.0
    %v215 = vmax.f32 %v187, 0.0
    %v216 = vmax.f32 %v190, 0.0
    %v217 = vmax.f32 %v192, 0.0
    %v218 = vmax.f32 %v195, 0.0
    %v219 = vmax.f32 %v197, 0.0
    %v220 = vmax.f32 %v200, 0.0
    %v221 = vmax.f32 %v202, 0.0
    %v222 = vmax.f32 %v205, 0.0
    %v223 = vmax.f32 %v207, 0.0
    %v224 = vmax.f32 %v210, 0.0
    %v225 = vmax.f32 %v212, 0.0
    %v226 = vld [vmem:[%s3] sm:$0xf]
    %v227 = vld [vmem:[%s3 + $0x4] sm:$0xf]
    %v228 = vld [vmem:[%s3 + $0x8] sm:$0xf]
    %v229 = vld [vmem:[%s3 + $0xc] sm:$0xf]
    %v230 = vld [vmem:[%s3 + $0x10] sm:$0xf]
    %v231 = vld [vmem:[%s3 + $0x14] sm:$0xf]
    %v232 = vld [vmem:[%s3 + $0x18] sm:$0xf]
    %v233 = vld [vmem:[%s3 + $0x1c] sm:$0xf]
    %v234 = vld [vmem:[%s3 + $0x20] sm:$0xf]
    %v235 = vld [vmem:[%s3 + $0x24] sm:$0xf]
    %v236 = vld [vmem:[%s3 + $0x28] sm:$0xf]
    %v237 = vld [vmem:[%s3 + $0x2c] sm:$0xf]
    %v238 = vld [vmem:[%s3 + $0x30] sm:$0xf]
    %v239 = vld [vmem:[%s3 + $0x34] sm:$0xf]
    %v240 = vld [vmem:[%s3 + $0x38] sm:$0xf]
    %v241 = vld [vmem:[%s3 + $0x3c] sm:$0xf]
    %v242 = vld [vmem:[%s3 + $0x40] sm:$0xf]
    %v243 = vld [vmem:[%s3 + $0x44] sm:$0xf]
    %v244 = vld [vmem:[%s3 + $0x48] sm:$0xf]
    %v245 = vld [vmem:[%s3 + $0x4c] sm:$0xf]
    %v246 = vld [vmem:[%s3 + $0x50] sm:$0xf]
    %v247 = vld [vmem:[%s3 + $0x54] sm:$0xf]
    %v248 = vld [vmem:[%s3 + $0x58] sm:$0xf]
    %v249 = vld [vmem:[%s3 + $0x5c] sm:$0xf]
    %v250 = vpack.c.bf16 %v215, %v214
    %v251 = vpack.c.bf16 %v217, %v216
    %v252 = vpack.c.bf16 %v219, %v218
    %v253 = vpack.c.bf16 %v221, %v220
    %v254 = vpack.c.bf16 %v223, %v222
    %v255 = vpack.c.bf16 %v225, %v224
    %v256 = vld [vmem:[%s4] sm:$0xff]
    %v257 = vld [vmem:[%s4 + $0x8] sm:$0xff]
    %v258 = vld [vmem:[%s4 + $0x10] sm:$0xff]
    %v259 = vld [vmem:[%s4 + $0x18] sm:$0xff]
    %v260 = vld [vmem:[%s4 + $0x20] sm:$0xff]
    %v261 = vld [vmem:[%s4 + $0x28] sm:$0xff]
    %v262 = vld [vmem:[%s4 + $0x30] sm:$0xff]
    %v263 = vld [vmem:[%s4 + $0x38] sm:$0xff]
    %v264 = vld [vmem:[%s4 + $0x40] sm:$0xff]
    %v265 = vld [vmem:[%s4 + $0x48] sm:$0xff]
    %v266 = vld [vmem:[%s4 + $0x50] sm:$0xff]
    %v267 = vld [vmem:[%s4 + $0x58] sm:$0xff]
    %v268 = vld [vmem:[%s4 + $0x60] sm:$0xff]
    %v269 = vld [vmem:[%s4 + $0x68] sm:$0xff]
    %v270 = vld [vmem:[%s4 + $0x70] sm:$0xff]
    %v271 = vld [vmem:[%s4 + $0x78] sm:$0xff]
    %v272 = vld [vmem:[%s4 + $0x80] sm:$0xff]
    %v273 = vld [vmem:[%s4 + $0x88] sm:$0xff]
    %v274 = vld [vmem:[%s4 + $0x90] sm:$0xff]
    %v275 = vld [vmem:[%s4 + $0x98] sm:$0xff]
    %v276 = vld [vmem:[%s4 + $0xa0] sm:$0xff]
    %v277 = vld [vmem:[%s4 + $0xa8] sm:$0xff]
    %v278 = vld [vmem:[%s4 + $0xb0] sm:$0xff]
    %v279 = vld [vmem:[%s4 + $0xb8] sm:$0xff]
    %281 = vset.pattern.permute.xlu0 0
    %282 = vperm.xlu0 %281, %v256
    %v283 = vpop.permute.xlu0 %282
    %286 = vset.pattern.permute.xlu0 0
    %287 = vperm.xlu0 %286, %v257
    %v288 = vpop.permute.xlu0 %287
    %291 = vset.pattern.permute.xlu0 0
    %292 = vperm.xlu0 %291, %v258
    %v293 = vpop.permute.xlu0 %292
    %296 = vset.pattern.permute.xlu0 0
    %297 = vperm.xlu0 %296, %v259
    %v298 = vpop.permute.xlu0 %297
    %301 = vset.pattern.permute.xlu0 0
    %302 = vperm.xlu0 %301, %v260
    %v303 = vpop.permute.xlu0 %302
    %306 = vset.pattern.permute.xlu0 0
    %307 = vperm.xlu0 %306, %v261
    %v308 = vpop.permute.xlu0 %307
    %311 = vset.pattern.permute.xlu0 0
    %312 = vperm.xlu0 %311, %v262
    %v313 = vpop.permute.xlu0 %312
    %316 = vset.pattern.permute.xlu0 0
    %317 = vperm.xlu0 %316, %v263
    %v318 = vpop.permute.xlu0 %317
    %321 = vset.pattern.permute.xlu0 0
    %322 = vperm.xlu0 %321, %v264
    %v323 = vpop.permute.xlu0 %322
    %326 = vset.pattern.permute.xlu0 0
    %327 = vperm.xlu0 %326, %v265
    %v328 = vpop.permute.xlu0 %327
    %331 = vset.pattern.permute.xlu0 0
    %332 = vperm.xlu0 %331, %v266
    %v333 = vpop.permute.xlu0 %332
    %336 = vset.pattern.permute.xlu0 0
    %337 = vperm.xlu0 %336, %v267
    %v338 = vpop.permute.xlu0 %337
    %341 = vset.pattern.permute.xlu0 0
    %342 = vperm.xlu0 %341, %v268
    %v343 = vpop.permute.xlu0 %342
    %346 = vset.pattern.permute.xlu0 0
    %347 = vperm.xlu0 %346, %v269
    %v348 = vpop.permute.xlu0 %347
    %351 = vset.pattern.permute.xlu0 0
    %352 = vperm.xlu0 %351, %v270
    %v353 = vpop.permute.xlu0 %352
    %356 = vset.pattern.permute.xlu0 0
    %357 = vperm.xlu0 %356, %v271
    %v358 = vpop.permute.xlu0 %357
    %361 = vset.pattern.permute.xlu0 0
    %362 = vperm.xlu0 %361, %v272
    %v363 = vpop.permute.xlu0 %362
    %366 = vset.pattern.permute.xlu0 0
    %367 = vperm.xlu0 %366, %v273
    %v368 = vpop.permute.xlu0 %367
    %371 = vset.pattern.permute.xlu0 0
    %372 = vperm.xlu0 %371, %v274
    %v373 = vpop.permute.xlu0 %372
    %376 = vset.pattern.permute.xlu0 0
    %377 = vperm.xlu0 %376, %v275
    %v378 = vpop.permute.xlu0 %377
    %381 = vset.pattern.permute.xlu0 0
    %382 = vperm.xlu0 %381, %v276
    %v383 = vpop.permute.xlu0 %382
    %386 = vset.pattern.permute.xlu0 0
    %387 = vperm.xlu0 %386, %v277
    %v388 = vpop.permute.xlu0 %387
    %391 = vset.pattern.permute.xlu0 0
    %392 = vperm.xlu0 %391, %v278
    %v393 = vpop.permute.xlu0 %392
    %396 = vset.pattern.permute.xlu0 0
    %397 = vperm.xlu0 %396, %v279
    %v398 = vpop.permute.xlu0 %397
    %v424 = vunpack.c.l.b16 %v226
    %v425 = vunpack.c.l.b16 %v227
    %v426 = vunpack.c.l.b16 %v228
    %v427 = vunpack.c.l.b16 %v229
    %v428 = vunpack.c.l.b16 %v230
    %v429 = vunpack.c.l.b16 %v231
    %v430 = vunpack.c.l.b16 %v232
    %v431 = vunpack.c.l.b16 %v233
    %v432 = vunpack.c.l.b16 %v234
    %v433 = vunpack.c.l.b16 %v235
    %v434 = vunpack.c.l.b16 %v236
    %v435 = vunpack.c.l.b16 %v237
    %v436 = vunpack.c.l.b16 %v238
    %v437 = vunpack.c.l.b16 %v239
    %v438 = vunpack.c.l.b16 %v240
    %v439 = vunpack.c.l.b16 %v241
    %v440 = vunpack.c.l.b16 %v242
    %v441 = vunpack.c.l.b16 %v243
    %v442 = vunpack.c.l.b16 %v244
    %v443 = vunpack.c.l.b16 %v245
    %v444 = vunpack.c.l.b16 %v246
    %v445 = vunpack.c.l.b16 %v247
    %v446 = vunpack.c.l.b16 %v248
    %v447 = vunpack.c.l.b16 %v249
    %v448 = vpack.c.b16 %v425, %v424
    %v449 = vpack.c.b16 %v427, %v426
    %v450 = vpack.c.b16 %v429, %v428
    %v451 = vpack.c.b16 %v431, %v430
    %v452 = vpack.c.b16 %v433, %v432
    %v453 = vpack.c.b16 %v435, %v434
    %v454 = vpack.c.b16 %v437, %v436
    %v455 = vpack.c.b16 %v439, %v438
    %v456 = vpack.c.b16 %v441, %v440
    %v457 = vpack.c.b16 %v443, %v442
    %v458 = vpack.c.b16 %v445, %v444
    %v459 = vpack.c.b16 %v447, %v446
    %vm460 = vcmask 785408
    %v462 = vsel %vm460, %v448, 0
    %v465 = vsel %vm460, %v449, 0
    %v468 = vsel %vm460, %v450, 0
    %v471 = vsel %vm460, %v451, 0
    %v474 = vsel %vm460, %v452, 0
    %v477 = vsel %vm460, %v453, 0
    %v480 = vsel %vm460, %v454, 0
    %v483 = vsel %vm460, %v455, 0
    %v486 = vsel %vm460, %v456, 0
    %v489 = vsel %vm460, %v457, 0
    %v492 = vsel %vm460, %v458, 0
    %v495 = vsel %vm460, %v459, 0
    %497 = vmatpush.bf16.msra.mxu0 0
    %498 = vmatpush.bf16.msra.mxu0 0
    %499 = vmatpush.bf16.msra.mxu0 %v255
    %500 = vmatpush.bf16.msra.mxu0 %v254
    %501 = vmatpush.bf16.msra.mxu0 %v253
    %502 = vmatpush.bf16.msra.mxu0 %v252
    %503 = vmatpush.bf16.msra.mxu0 %v251
    %504 = vmatpush.bf16.msra.mxu0 %v250
    %505 = vmatmul.bf16.gmra.mxu0 %v462
    %v506 = vpop.f32.mrf.mxu0
    %v507 = vadd.f32 %v283, %v506
    %v508 = vpop.f32.mrf.mxu0
    %v509 = vadd.f32 %v288, %v508
    %510 = vmatmul.bf16.gmra.mxu0 %v465
    %v511 = vpop.f32.mrf.mxu0
    %v512 = vadd.f32 %v293, %v511
    %v513 = vpop.f32.mrf.mxu0
    %v514 = vadd.f32 %v298, %v513
    %515 = vmatmul.bf16.gmra.mxu0 %v468
    %v516 = vpop.f32.mrf.mxu0
    %v517 = vadd.f32 %v303, %v516
    %v518 = vpop.f32.mrf.mxu0
    %v519 = vadd.f32 %v308, %v518
    %520 = vmatmul.bf16.gmra.mxu0 %v471
    %v521 = vpop.f32.mrf.mxu0
    %v522 = vadd.f32 %v313, %v521
    %v523 = vpop.f32.mrf.mxu0
    %v524 = vadd.f32 %v318, %v523
    %525 = vmatmul.bf16.gmra.mxu0 %v474
    %v526 = vpop.f32.mrf.mxu0
    %v527 = vadd.f32 %v323, %v526
    %v528 = vpop.f32.mrf.mxu0
    %v529 = vadd.f32 %v328, %v528
    %530 = vmatmul.bf16.gmra.mxu0 %v477
    %v531 = vpop.f32.mrf.mxu0
    %v532 = vadd.f32 %v333, %v531
    %v533 = vpop.f32.mrf.mxu0
    %v534 = vadd.f32 %v338, %v533
    %535 = vmatmul.bf16.gmra.mxu0 %v480
    %v536 = vpop.f32.mrf.mxu0
    %v537 = vadd.f32 %v343, %v536
    %v538 = vpop.f32.mrf.mxu0
    %v539 = vadd.f32 %v348, %v538
    %540 = vmatmul.bf16.gmra.mxu0 %v483
    %v541 = vpop.f32.mrf.mxu0
    %v542 = vadd.f32 %v353, %v541
    %v543 = vpop.f32.mrf.mxu0
    %v544 = vadd.f32 %v358, %v543
    %545 = vmatmul.bf16.gmra.mxu0 %v486
    %v546 = vpop.f32.mrf.mxu0
    %v547 = vadd.f32 %v363, %v546
    %v548 = vpop.f32.mrf.mxu0
    %v549 = vadd.f32 %v368, %v548
    %550 = vmatmul.bf16.gmra.mxu0 %v489
    %v551 = vpop.f32.mrf.mxu0
    %v552 = vadd.f32 %v373, %v551
    %v553 = vpop.f32.mrf.mxu0
    %v554 = vadd.f32 %v378, %v553
    %555 = vmatmul.bf16.gmra.mxu0 %v492
    %v556 = vpop.f32.mrf.mxu0
    %v557 = vadd.f32 %v383, %v556
    %v558 = vpop.f32.mrf.mxu0
    %v559 = vadd.f32 %v388, %v558
    %560 = vmatmul.bf16.gmra.mxu0 %v495
    %v561 = vpop.f32.mrf.mxu0
    %v562 = vadd.f32 %v393, %v561
    %v563 = vpop.f32.mrf.mxu0
    %v564 = vadd.f32 %v398, %v563
    %565 = vdwg.mxu0
    %v566 = vmax.f32 %v507, 0.0
    %v567 = vmax.f32 %v509, 0.0
    %v568 = vmax.f32 %v512, 0.0
    %v569 = vmax.f32 %v514, 0.0
    %v570 = vmax.f32 %v517, 0.0
    %v571 = vmax.f32 %v519, 0.0
    %v572 = vmax.f32 %v522, 0.0
    %v573 = vmax.f32 %v524, 0.0
    %v574 = vmax.f32 %v527, 0.0
    %v575 = vmax.f32 %v529, 0.0
    %v576 = vmax.f32 %v532, 0.0
    %v577 = vmax.f32 %v534, 0.0
    %v578 = vmax.f32 %v537, 0.0
    %v579 = vmax.f32 %v539, 0.0
    %v580 = vmax.f32 %v542, 0.0
    %v581 = vmax.f32 %v544, 0.0
    %v582 = vmax.f32 %v547, 0.0
    %v583 = vmax.f32 %v549, 0.0
    %v584 = vmax.f32 %v552, 0.0
    %v585 = vmax.f32 %v554, 0.0
    %v586 = vmax.f32 %v557, 0.0
    %v587 = vmax.f32 %v559, 0.0
    %v588 = vmax.f32 %v562, 0.0
    %v589 = vmax.f32 %v564, 0.0
    %v590 = vld [vmem:[%s5] sm:$0xff]
    %v591 = vld [vmem:[%s5 + $0x8] sm:$0xff]
    %v592 = vld [vmem:[%s5 + $0x10] sm:$0xff]
    %v593 = vld [vmem:[%s5 + $0x18] sm:$0xff]
    %v594 = vld [vmem:[%s5 + $0x20] sm:$0xff]
    %v595 = vld [vmem:[%s5 + $0x28] sm:$0xff]
    %v596 = vld [vmem:[%s5 + $0x30] sm:$0xff]
    %v597 = vld [vmem:[%s5 + $0x38] sm:$0xff]
    %v598 = vld [vmem:[%s5 + $0x40] sm:$0xff]
    %v599 = vld [vmem:[%s5 + $0x48] sm:$0xff]
    %v600 = vld [vmem:[%s5 + $0x50] sm:$0xff]
    %v601 = vld [vmem:[%s5 + $0x58] sm:$0xff]
    %v602 = vld [vmem:[%s5 + $0x60] sm:$0xff]
    %v603 = vld [vmem:[%s5 + $0x68] sm:$0xff]
    %v604 = vld [vmem:[%s5 + $0x70] sm:$0xff]
    %v605 = vld [vmem:[%s5 + $0x78] sm:$0xff]
    %v606 = vpack.c.bf16 %v567, %v566
    %v607 = vpack.c.bf16 %v569, %v568
    %v608 = vpack.c.bf16 %v571, %v570
    %v609 = vpack.c.bf16 %v573, %v572
    %v610 = vpack.c.bf16 %v575, %v574
    %v611 = vpack.c.bf16 %v577, %v576
    %v612 = vpack.c.bf16 %v579, %v578
    %v613 = vpack.c.bf16 %v581, %v580
    %v614 = vpack.c.bf16 %v583, %v582
    %v615 = vpack.c.bf16 %v585, %v584
    %v616 = vpack.c.bf16 %v587, %v586
    %v617 = vpack.c.bf16 %v589, %v588
    %v618 = vld [vmem:[%s6] sm:$0xff]
    %v619 = vld [vmem:[%s6 + $0x8] sm:$0xff]
    %v620 = vld [vmem:[%s6 + $0x10] sm:$0xff]
    %v621 = vld [vmem:[%s6 + $0x18] sm:$0xff]
    %v622 = vld [vmem:[%s6 + $0x20] sm:$0xff]
    %v623 = vld [vmem:[%s6 + $0x28] sm:$0xff]
    %v624 = vld [vmem:[%s6 + $0x30] sm:$0xff]
    %v625 = vld [vmem:[%s6 + $0x38] sm:$0xff]
    %v626 = vld [vmem:[%s6 + $0x40] sm:$0xff]
    %v627 = vld [vmem:[%s6 + $0x48] sm:$0xff]
    %v628 = vld [vmem:[%s6 + $0x50] sm:$0xff]
    %v629 = vld [vmem:[%s6 + $0x58] sm:$0xff]
    %v630 = vld [vmem:[%s6 + $0x60] sm:$0xff]
    %v631 = vld [vmem:[%s6 + $0x68] sm:$0xff]
    %v632 = vld [vmem:[%s6 + $0x70] sm:$0xff]
    %v633 = vld [vmem:[%s6 + $0x78] sm:$0xff]
    %635 = vset.pattern.permute.xlu0 0
    %636 = vperm.xlu0 %635, %v618
    %v637 = vpop.permute.xlu0 %636
    %640 = vset.pattern.permute.xlu0 0
    %641 = vperm.xlu0 %640, %v619
    %v642 = vpop.permute.xlu0 %641
    %645 = vset.pattern.permute.xlu0 0
    %646 = vperm.xlu0 %645, %v620
    %v647 = vpop.permute.xlu0 %646
    %650 = vset.pattern.permute.xlu0 0
    %651 = vperm.xlu0 %650, %v621
    %v652 = vpop.permute.xlu0 %651
    %655 = vset.pattern.permute.xlu0 0
    %656 = vperm.xlu0 %655, %v622
    %v657 = vpop.permute.xlu0 %656
    %660 = vset.pattern.permute.xlu0 0
    %661 = vperm.xlu0 %660, %v623
    %v662 = vpop.permute.xlu0 %661
    %665 = vset.pattern.permute.xlu0 0
    %666 = vperm.xlu0 %665, %v624
    %v667 = vpop.permute.xlu0 %666
    %670 = vset.pattern.permute.xlu0 0
    %671 = vperm.xlu0 %670, %v625
    %v672 = vpop.permute.xlu0 %671
    %675 = vset.pattern.permute.xlu0 0
    %676 = vperm.xlu0 %675, %v626
    %v677 = vpop.permute.xlu0 %676
    %680 = vset.pattern.permute.xlu0 0
    %681 = vperm.xlu0 %680, %v627
    %v682 = vpop.permute.xlu0 %681
    %685 = vset.pattern.permute.xlu0 0
    %686 = vperm.xlu0 %685, %v628
    %v687 = vpop.permute.xlu0 %686
    %690 = vset.pattern.permute.xlu0 0
    %691 = vperm.xlu0 %690, %v629
    %v692 = vpop.permute.xlu0 %691
    %695 = vset.pattern.permute.xlu0 0
    %696 = vperm.xlu0 %695, %v630
    %v697 = vpop.permute.xlu0 %696
    %700 = vset.pattern.permute.xlu0 0
    %701 = vperm.xlu0 %700, %v631
    %v702 = vpop.permute.xlu0 %701
    %705 = vset.pattern.permute.xlu0 0
    %706 = vperm.xlu0 %705, %v632
    %v707 = vpop.permute.xlu0 %706
    %710 = vset.pattern.permute.xlu0 0
    %711 = vperm.xlu0 %710, %v633
    %v712 = vpop.permute.xlu0 %711
    %v730 = vunpack.c.l.b16 %v590
    %v731 = vunpack.c.h.b16 %v590
    %v732 = vunpack.c.l.b16 %v591
    %v733 = vunpack.c.h.b16 %v591
    %v734 = vunpack.c.l.b16 %v592
    %v735 = vunpack.c.h.b16 %v592
    %v736 = vunpack.c.l.b16 %v593
    %v737 = vunpack.c.h.b16 %v593
    %v738 = vunpack.c.l.b16 %v594
    %v739 = vunpack.c.h.b16 %v594
    %v740 = vunpack.c.l.b16 %v595
    %v741 = vunpack.c.h.b16 %v595
    %v742 = vunpack.c.l.b16 %v596
    %v743 = vunpack.c.h.b16 %v596
    %v744 = vunpack.c.l.b16 %v597
    %v745 = vunpack.c.h.b16 %v597
    %v746 = vunpack.c.l.b16 %v598
    %v747 = vunpack.c.h.b16 %v598
    %v748 = vunpack.c.l.b16 %v599
    %v749 = vunpack.c.h.b16 %v599
    %v750 = vunpack.c.l.b16 %v600
    %v751 = vunpack.c.h.b16 %v600
    %v752 = vunpack.c.l.b16 %v601
    %v753 = vunpack.c.h.b16 %v601
    %v754 = vunpack.c.l.b16 %v602
    %v755 = vunpack.c.h.b16 %v602
    %v756 = vunpack.c.l.b16 %v603
    %v757 = vunpack.c.h.b16 %v603
    %v758 = vunpack.c.l.b16 %v604
    %v759 = vunpack.c.h.b16 %v604
    %v760 = vunpack.c.l.b16 %v605
    %v761 = vunpack.c.h.b16 %v605
    %v762 = vpack.c.b16 %v732, %v730
    %v763 = vpack.c.b16 %v733, %v731
    %v764 = vpack.c.b16 %v736, %v734
    %v765 = vpack.c.b16 %v737, %v735
    %v766 = vpack.c.b16 %v740, %v738
    %v767 = vpack.c.b16 %v741, %v739
    %v768 = vpack.c.b16 %v744, %v742
    %v769 = vpack.c.b16 %v745, %v743
    %v770 = vpack.c.b16 %v748, %v746
    %v771 = vpack.c.b16 %v749, %v747
    %v772 = vpack.c.b16 %v752, %v750
    %v773 = vpack.c.b16 %v753, %v751
    %v774 = vpack.c.b16 %v756, %v754
    %v775 = vpack.c.b16 %v757, %v755
    %v776 = vpack.c.b16 %v760, %v758
    %v777 = vpack.c.b16 %v761, %v759
    %vm786 = vcmask 523264
    %v788 = vsel %vm786, %v763, 0
    %v791 = vsel %vm786, %v765, 0
    %v794 = vsel %vm786, %v767, 0
    %v797 = vsel %vm786, %v769, 0
    %v800 = vsel %vm786, %v771, 0
    %v803 = vsel %vm786, %v773, 0
    %v806 = vsel %vm786, %v775, 0
    %v809 = vsel %vm786, %v777, 0
    %811 = vmatpush.bf16.msra.mxu0 %v613
    %812 = vmatpush.bf16.msra.mxu0 %v612
    %813 = vmatpush.bf16.msra.mxu0 %v611
    %814 = vmatpush.bf16.msra.mxu0 %v610
    %815 = vmatpush.bf16.msra.mxu0 %v609
    %816 = vmatpush.bf16.msra.mxu0 %v608
    %817 = vmatpush.bf16.msra.mxu0 %v607
    %818 = vmatpush.bf16.msra.mxu0 %v606
    %819 = vmatmul.bf16.gmra.mxu0 %v762
    %v820 = vpop.f32.mrf.mxu0
    %v821 = vadd.f32 %v637, %v820
    %v822 = vpop.f32.mrf.mxu0
    %v823 = vadd.f32 %v642, %v822
    %824 = vmatmul.bf16.gmra.mxu0 %v764
    %v825 = vpop.f32.mrf.mxu0
    %v826 = vadd.f32 %v647, %v825
    %v827 = vpop.f32.mrf.mxu0
    %v828 = vadd.f32 %v652, %v827
    %829 = vmatmul.bf16.gmra.mxu0 %v766
    %v830 = vpop.f32.mrf.mxu0
    %v831 = vadd.f32 %v657, %v830
    %v832 = vpop.f32.mrf.mxu0
    %v833 = vadd.f32 %v662, %v832
    %834 = vmatmul.bf16.gmra.mxu0 %v768
    %v835 = vpop.f32.mrf.mxu0
    %v836 = vadd.f32 %v667, %v835
    %v837 = vpop.f32.mrf.mxu0
    %v838 = vadd.f32 %v672, %v837
    %839 = vmatmul.bf16.gmra.mxu0 %v770
    %v840 = vpop.f32.mrf.mxu0
    %v841 = vadd.f32 %v677, %v840
    %v842 = vpop.f32.mrf.mxu0
    %v843 = vadd.f32 %v682, %v842
    %844 = vmatmul.bf16.gmra.mxu0 %v772
    %v845 = vpop.f32.mrf.mxu0
    %v846 = vadd.f32 %v687, %v845
    %v847 = vpop.f32.mrf.mxu0
    %v848 = vadd.f32 %v692, %v847
    %849 = vmatmul.bf16.gmra.mxu0 %v774
    %v850 = vpop.f32.mrf.mxu0
    %v851 = vadd.f32 %v697, %v850
    %v852 = vpop.f32.mrf.mxu0
    %v853 = vadd.f32 %v702, %v852
    %854 = vmatmul.bf16.gmra.mxu0 %v776
    %v855 = vpop.f32.mrf.mxu0
    %v856 = vadd.f32 %v707, %v855
    %v857 = vpop.f32.mrf.mxu0
    %v858 = vadd.f32 %v712, %v857
    %859 = vdwg.mxu0
    %860 = vmatpush.bf16.msra.mxu0 0
    %861 = vmatpush.bf16.msra.mxu0 0
    %862 = vmatpush.bf16.msra.mxu0 0
    %863 = vmatpush.bf16.msra.mxu0 0
    %864 = vmatpush.bf16.msra.mxu0 %v617
    %865 = vmatpush.bf16.msra.mxu0 %v616
    %866 = vmatpush.bf16.msra.mxu0 %v615
    %867 = vmatpush.bf16.msra.mxu0 %v614
    %868 = vmatmul.bf16.gmra.mxu0 %v788
    %v869 = vpop.f32.mrf.mxu0
    %v870 = vadd.f32 %v821, %v869
    %v871 = vpop.f32.mrf.mxu0
    %v872 = vadd.f32 %v823, %v871
    %873 = vmatmul.bf16.gmra.mxu0 %v791
    %v874 = vpop.f32.mrf.mxu0
    %v875 = vadd.f32 %v826, %v874
    %v876 = vpop.f32.mrf.mxu0
    %v877 = vadd.f32 %v828, %v876
    %878 = vmatmul.bf16.gmra.mxu0 %v794
    %v879 = vpop.f32.mrf.mxu0
    %v880 = vadd.f32 %v831, %v879
    %v881 = vpop.f32.mrf.mxu0
    %v882 = vadd.f32 %v833, %v881
    %883 = vmatmul.bf16.gmra.mxu0 %v797
    %v884 = vpop.f32.mrf.mxu0
    %v885 = vadd.f32 %v836, %v884
    %v886 = vpop.f32.mrf.mxu0
    %v887 = vadd.f32 %v838, %v886
    %888 = vmatmul.bf16.gmra.mxu0 %v800
    %v889 = vpop.f32.mrf.mxu0
    %v890 = vadd.f32 %v841, %v889
    %v891 = vpop.f32.mrf.mxu0
    %v892 = vadd.f32 %v843, %v891
    %893 = vmatmul.bf16.gmra.mxu0 %v803
    %v894 = vpop.f32.mrf.mxu0
    %v895 = vadd.f32 %v846, %v894
    %v896 = vpop.f32.mrf.mxu0
    %v897 = vadd.f32 %v848, %v896
    %898 = vmatmul.bf16.gmra.mxu0 %v806
    %v899 = vpop.f32.mrf.mxu0
    %v900 = vadd.f32 %v851, %v899
    %v901 = vpop.f32.mrf.mxu0
    %v902 = vadd.f32 %v853, %v901
    %903 = vmatmul.bf16.gmra.mxu0 %v809
    %v904 = vpop.f32.mrf.mxu0
    %v905 = vadd.f32 %v856, %v904
    %v906 = vpop.f32.mrf.mxu0
    %v907 = vadd.f32 %v858, %v906
    %908 = vdwg.mxu0
    %v909 = vmax.f32 %v870, 0.0
    %v910 = vmax.f32 %v872, 0.0
    %v911 = vmax.f32 %v875, 0.0
    %v912 = vmax.f32 %v877, 0.0
    %v913 = vmax.f32 %v880, 0.0
    %v914 = vmax.f32 %v882, 0.0
    %v915 = vmax.f32 %v885, 0.0
    %v916 = vmax.f32 %v887, 0.0
    %v917 = vmax.f32 %v890, 0.0
    %v918 = vmax.f32 %v892, 0.0
    %v919 = vmax.f32 %v895, 0.0
    %v920 = vmax.f32 %v897, 0.0
    %v921 = vmax.f32 %v900, 0.0
    %v922 = vmax.f32 %v902, 0.0
    %v923 = vmax.f32 %v905, 0.0
    %v924 = vmax.f32 %v907, 0.0
    %v925 = vld [vmem:[%s7] sm:$0xf]
    %v926 = vpack.c.bf16 %v910, %v909
    %v927 = vpack.c.bf16 %v912, %v911
    %v928 = vpack.c.bf16 %v914, %v913
    %v929 = vpack.c.bf16 %v916, %v915
    %v930 = vpack.c.bf16 %v918, %v917
    %v931 = vpack.c.bf16 %v920, %v919
    %v932 = vpack.c.bf16 %v922, %v921
    %v933 = vpack.c.bf16 %v924, %v923
    %v934 = vld [vmem:[%s8] sm:$0xff]
    %936 = vset.pattern.permute.xlu0 0
    %937 = vperm.xlu0 %936, %v934
    %v938 = vpop.permute.xlu0 %937
    %940 = vmatpush.bf16.msra.mxu0 %v933
    %941 = vmatpush.bf16.msra.mxu0 %v932
    %942 = vmatpush.bf16.msra.mxu0 %v931
    %943 = vmatpush.bf16.msra.mxu0 %v930
    %944 = vmatpush.bf16.msra.mxu0 %v929
    %945 = vmatpush.bf16.msra.mxu0 %v928
    %946 = vmatpush.bf16.msra.mxu0 %v927
    %947 = vmatpush.bf16.msra.mxu0 %v926
    %948 = vmatmul.bf16.gmra.mxu0 %v925
    %v949 = vpop.f32.mrf.mxu0
    %v950 = vadd.f32 %v938, %v949
    %v951 = vpop.f32.mrf.mxu0
    %952 = vdwg.mxu0
    %953 = vst [vmem:[#allocation2] sm:$0xff] %v950
    // Predicated region
    $region38: #{tpu_custom_call.1} parent=1 // pred_check
      _
    $region39: #{tpu_custom_call.1} parent=1 // pred_check_branch
      %955 = sbr.rel (0) target = $region41
    $region40: #{tpu_custom_call.1} parent=1 // pred_region
      %957 = vsyncadd [#allocation3], 0
      %s959 = sshll.u32 [#allocation2], 4
      %s960 = int_to_ptr.vmem [resolvable:$true] %s959
      %s961 = sshll.u32 %s9, 4
      %s962 = int_to_ptr.hbm [resolvable:$true] %s961
      %964 = dma.vmem_to_hbm [thread:$0]  %s960, 128, %s962, [#allocation3]
    $region41: #{tpu_custom_call.1} parent=1 // pred_fallthru
      _
    // Predicated region
    $region42: #{tpu_custom_call.1} parent=1 // pred_check
      _
    $region43: #{tpu_custom_call.1} parent=1 // pred_check_branch
      %966 = sbr.rel (0) target = $region45
    $region44: #{tpu_custom_call.1} parent=1 // pred_region
      %968 = dma.done [#allocation3], 128
    $region45: #{tpu_custom_call.1} parent=1 // pred_fallthru
      _
    %969 = vsyncpa [#allocation3], 1

</llo_original>
